<compile_context>
chip_gen: v6e
topology: v6e:2x2x1
jax: 0.10.0
libtpu: 0.0.40
codegen_flags: <defaults>
</compile_context>

<pallas_src>
import jax
import jax.numpy as jnp
from jax import lax
from jax.experimental import pallas as pl
from jax.experimental.pallas import tpu as pltpu

EMB_DIM = 50
N_DOWS, N_HOURS, N_TZS, N_DAYS = 7, 24, 28, 31   # one-hot widths (total 90)


# -----------------------------------------------------------------------------
# Pallas kernel: whole LSTM recurrence + fused Linear(H,1)+sigmoid epilogue.
#   gates_ref : (B, S, 4H)  precomputed  x_t @ W_ih^T + b_ih + b_hh    (f32)
#   whh_ref   : (H, 4H)     W_hh^T                                     (f32)
#   wfin_ref  : (1, H)      final-linear weight                        (f32)
#   bfin_ref  : (1,)        final-linear bias (SMEM scalar)            (f32)
#   out_ref   : (B, S, H+1) [h_t | sigmoid(h_t @ w_final^T + b_final)]
# Gate order follows PyTorch nn.LSTM: [i, f, g, o].
# -----------------------------------------------------------------------------
def lstm_recurrence_kernel(gates_ref, whh_ref, wfin_ref, bfin_ref, out_ref):
    B, S, G = gates_ref.shape
    H = whh_ref.shape[0]

    # Loop-invariant values, hoisted off the serial path.
    w_hh = whh_ref[...].astype(jnp.bfloat16)              # (H, 4H), cast once
    lane = lax.broadcasted_iota(jnp.int32, (B, G), 1)
    g_lanes = (lane >= 2 * H) & (lane < 3 * H)             # cell-candidate gate lanes

    def step(t, carry):
        h, c = carry                                       # (B, H) f32, in vregs
        # Recurrent matmul: bf16 operands, f32 accumulation (single MXU pass).
        g_x = gates_ref[:, pl.ds(t, 1)][:, 0]              # (B, 4H)
        g = g_x + jnp.dot(h.astype(jnp.bfloat16), w_hh,
                          preferred_element_type=jnp.float32)
        # One sigmoid + one tanh over the full (B, 4H) vreg, lane-select tanh.
        act = jnp.where(g_lanes, jnp.tanh(g), jax.nn.sigmoid(g))
        i = act[:, 0 * H:1 * H]
        f = act[:, 1 * H:2 * H]
        gg = act[:, 2 * H:3 * H]
        o = act[:, 3 * H:4 * H]
        c_new = f * c + i * gg
        h_new = o * jnp.tanh(c_new)
        out_ref[:, pl.ds(t, 1), 0:H] = h_new[:, None, :].astype(out_ref.dtype)
        return h_new, c_new

    init = (jnp.zeros((B, H), jnp.float32), jnp.zeros((B, H), jnp.float32))
    # Fully unroll short statically-known trip counts; partial unroll otherwise.
    lax.fori_loop(0, S, step, init, unroll=(S if S <= 32 else 4))

    # Fused epilogue: Linear(H, 1) + sigmoid over the whole (B, S, H) slab
    # (MXU/VPU idle after the recurrence; removes 3-4 tiny XLA dispatches).
    h_all = out_ref[:, :, 0:H]                             # (B, S, H)
    w_f = wfin_ref[...]                                    # (1, H) -> broadcasts
    logits = jnp.sum(h_all * w_f, axis=-1, keepdims=True) + bfin_ref[0]
    out_ref[:, :, H:H + 1] = jax.nn.sigmoid(logits).astype(out_ref.dtype)


def run_lstm_recurrence(gates_bsg, whh_t, w_final, b_final):
    """gates_bsg: (B, S, 4H) f32 gate pre-activations; whh_t: (H, 4H);
    w_final: (1, H); b_final: (1,).  Returns (B, S, H+1) f32."""
    B, S, G = gates_bsg.shape
    H = whh_t.shape[0]
    assert G == 4 * H
    return pl.pallas_call(
        lstm_recurrence_kernel,
        out_shape=jax.ShapeDtypeStruct((B, S, H + 1), jnp.float32),
        in_specs=[
            pl.BlockSpec(memory_space=pltpu.MemorySpace.VMEM),   # gate slab
            pl.BlockSpec(memory_space=pltpu.MemorySpace.VMEM),   # W_hh^T
            pl.BlockSpec(memory_space=pltpu.MemorySpace.VMEM),   # w_final
            pl.BlockSpec(memory_space=pltpu.MemorySpace.SMEM),   # b_final scalar
        ],
        out_specs=pl.BlockSpec(memory_space=pltpu.MemorySpace.VMEM),
    )(gates_bsg, whh_t, w_final, b_final)


# -----------------------------------------------------------------------------
# Parameters (deterministic synthetic init, PyTorch-LSTM-like shapes)
# -----------------------------------------------------------------------------
def init_params(key, input_dim, output_dim,
                max_users, max_products, max_aisles, max_depts):
    ks = jax.random.split(key, 10)
    H = output_dim
    s = 1.0 / jnp.sqrt(jnp.float32(H))
    u = lambda k, shp: jax.random.uniform(k, shp, jnp.float32, -s, s)
    return {
        # nn.LSTM(input_dim, output_dim): weight_ih (4H, D), weight_hh (4H, H)
        "w_ih": u(ks[0], (4 * H, input_dim)),
        "w_hh": u(ks[1], (4 * H, H)),
        "b_ih": u(ks[2], (4 * H,)),
        "b_hh": u(ks[3], (4 * H,)),
        # embeddings
        "user_emb": jax.random.normal(ks[4], (max_users, EMB_DIM), jnp.float32),
        "prod_emb": jax.random.normal(ks[5], (max_products, EMB_DIM), jnp.float32),
        "aisle_emb": jax.random.normal(ks[6], (max_aisles, EMB_DIM), jnp.float32),
        "dept_emb": jax.random.normal(ks[7], (max_depts, EMB_DIM), jnp.float32),
        # nn.Linear(output_dim, 1)
        "w_final": u(ks[8], (1, H)),
        "b_final": u(ks[9], (1,)),
    }


# -----------------------------------------------------------------------------
# Forward pass == ProdLSTM.forward
# -----------------------------------------------------------------------------
def prod_lstm_forward(params, inputs, users, products, aisles, depts,
                      dows, hours, tzs, days, max_len):
    B, seq_len, _ = inputs.shape
    # The embedding is repeated over max_len (as in the PyTorch module); the
    # concat below requires seq_len == max_len.
    assert seq_len == max_len, "ProdLSTM requires seq_len == max_len"

    # one-hots (glue)
    oh_tzs = jax.nn.one_hot(tzs, N_TZS, dtype=jnp.float32)
    oh_dows = jax.nn.one_hot(dows, N_DOWS, dtype=jnp.float32)
    oh_hours = jax.nn.one_hot(hours, N_HOURS, dtype=jnp.float32)
    oh_days = jax.nn.one_hot(days, N_DAYS, dtype=jnp.float32)
    tmp = jnp.concatenate([oh_dows, oh_hours, oh_tzs, oh_days], axis=-1)

    # embeddings (gather glue); broadcast over time instead of materialised repeat
    emb = jnp.concatenate([params["user_emb"][users],
                           params["prod_emb"][products],
                           params["aisle_emb"][aisles],
                           params["dept_emb"][depts]], axis=-1)          # (B, 200)
    emb = jnp.broadcast_to(emb[:, None, :], (B, max_len, emb.shape[-1]))

    full_inputs = jnp.concatenate([inputs, tmp, emb], axis=-1)           # (B, S, D)

    # ---- hoisted, time-parallel input projection (off the serial path) ----
    # Default MXU precision: single-pass bf16 with f32 accumulation is ample
    # for gate pre-activations that feed saturating sigmoids/tanh.
    bias = params["b_ih"] + params["b_hh"]                               # (4H,)
    gates_bsg = jnp.einsum("bsd,dg->bsg", full_inputs,
                           params["w_ih"].T) + bias                      # (B, S, 4H)

    # ---- serial recurrence + fused Linear(H,1)+sigmoid epilogue (Pallas) ----
    outputs = run_lstm_recurrence(gates_bsg, params["w_hh"].T,
                                  params["w_final"], params["b_final"])  # (B, S, H+1)
    return outputs, full_inputs


# -----------------------------------------------------------------------------
# Pure-JAX reference (lax.scan), PyTorch nn.LSTM semantics, for a sanity check
# -----------------------------------------------------------------------------
def lstm_reference(full_inputs, params):
    B, _, _ = full_inputs.shape
    H = params["w_hh"].shape[1]
    wih_t = params["w_ih"].T
    whh_t = params["w_hh"].T
    b = params["b_ih"] + params["b_hh"]

    def step(carry, x_t):
        h, c = carry
        g = jnp.dot(x_t, wih_t) + jnp.dot(h, whh_t) + b
        i = jax.nn.sigmoid(g[:, 0 * H:1 * H])
        f = jax.nn.sigmoid(g[:, 1 * H:2 * H])
        g_ = jnp.tanh(g[:, 2 * H:3 * H])
        o = jax.nn.sigmoid(g[:, 3 * H:4 * H])
        c = f * c + i * g_
        h = o * jnp.tanh(c)
        return (h, c), h

    x_sbd = jnp.transpose(full_inputs, (1, 0, 2))
    (_, _), hs = lax.scan(step, (jnp.zeros((B, H), jnp.float32),
                                 jnp.zeros((B, H), jnp.float32)), x_sbd)
    return jnp.transpose(hs, (1, 0, 2))                                  # (B, S, H)


if __name__ == "__main__":
    # small, self-consistent shapes
    batch = 2
    max_len = 8           # seq_len must equal max_len
    feat = 10             # raw per-timestep features
    input_dim = feat + (N_DOWS + N_HOURS + N_TZS + N_DAYS) + 4 * EMB_DIM  # 300
    output_dim = 32
    max_users, max_products, max_aisles, max_depts = 100, 200, 30, 20

    key = jax.random.PRNGKey(0)
    kp, k1, k2, k3, k4, k5, k6, k7, k8, k9 = jax.random.split(key, 10)

    params = init_params(kp, input_dim, output_dim,
                         max_users, max_products, max_aisles, max_depts)

    inputs = jax.random.normal(k1, (batch, max_len, feat), jnp.float32)
    users = jax.random.randint(k2, (batch,), 0, max_users)
    products = jax.random.randint(k3, (batch,), 0, max_products)
    aisles = jax.random.randint(k4, (batch,), 0, max_aisles)
    depts = jax.random.randint(k5, (batch,), 0, max_depts)
    dows = jax.random.randint(k6, (batch, max_len), 0, N_DOWS)
    hours = jax.random.randint(k7, (batch, max_len), 0, N_HOURS)
    tzs = jax.random.randint(k8, (batch, max_len), 0, N_TZS)
    days = jax.random.randint(k9, (batch, max_len), 0, N_DAYS)

    fwd = jax.jit(prod_lstm_forward, static_argnames=("max_len",))
    outputs, cat_inputs = fwd(params, inputs, users, products, aisles, depts,
                              dows, hours, tzs, days, max_len=max_len)
    jax.block_until_ready((outputs, cat_inputs))

    assert outputs.shape == (batch, max_len, output_dim + 1)
    assert cat_inputs.shape == (batch, max_len, input_dim)

    # Sanity check vs a pure-JAX reference (same default-precision matmul
    # class as the kernel's bf16-operand / f32-accumulate path).  Tolerance is
    # loose on purpose; real semantic bugs (gate order, time index, init,
    # epilogue wiring) produce O(0.1) errors.
    ref_h = lstm_reference(cat_inputs, params)                            # (B, S, H)
    ref_p = jax.nn.sigmoid(
        jnp.einsum("bsh,oh->bso", ref_h, params["w_final"]) + params["b_final"])
    err_h = float(jnp.max(jnp.abs(outputs[..., :output_dim] - ref_h)))
    err_p = float(jnp.max(jnp.abs(outputs[..., output_dim:] - ref_p)))
    assert err_h < 1e-2, f"hidden-state mismatch vs reference: {err_h}"
    assert err_p < 1e-2, f"final-prob mismatch vs reference: {err_p}"

    print("KERNEL_OK")
</pallas_src>

<mosaic_0001>
module attributes {stable_mosaic.version = 11 : i64} {
  func.func @lstm_recurrence_kernel(%arg0: memref<2x8x128xf32, #tpu.memory_space<vmem>>, %arg1: memref<32x128xf32, #tpu.memory_space<vmem>>, %arg2: memref<1x32xf32, #tpu.memory_space<vmem>>, %arg3: memref<1xf32, #tpu.memory_space<smem>>, %arg4: memref<2x8x33xf32, #tpu.memory_space<vmem>>) attributes {dimension_semantics = [], scalar_prefetch = 0 : i64, scratch_operands = 0 : i64, tpu.core_type = #tpu.core_type<tc>} {
    %c0 = arith.constant 0 : index
    %c0_0 = arith.constant 0 : index
    %0 = vector.load %arg1[%c0, %c0_0] : memref<32x128xf32, #tpu.memory_space<vmem>>, vector<32x128xf32>
    %1 = arith.truncf %0 : vector<32x128xf32> to vector<32x128xbf16>
    %2 = tpu.iota {dimensions = array<i32: 1>} : vector<2x128xi32>
    %c64_i32 = arith.constant 64 : i32
    %3 = vector.broadcast %c64_i32 : i32 to vector<2x128xi32>
    %4 = arith.cmpi sge, %2, %3 : vector<2x128xi32>
    %c96_i32 = arith.constant 96 : i32
    %5 = vector.broadcast %c96_i32 : i32 to vector<2x128xi32>
    %6 = arith.cmpi slt, %2, %5 : vector<2x128xi32>
    %7 = arith.andi %4, %6 : vector<2x128xi1>
    %cst = arith.constant 0.000000e+00 : f32
    %8 = vector.broadcast %cst : f32 to vector<2x32xf32>
    %cst_1 = arith.constant 0.000000e+00 : f32
    %9 = vector.broadcast %cst_1 : f32 to vector<2x32xf32>
    %c0_i32 = arith.constant 0 : i32
    %c0_2 = arith.constant 0 : index
    %10 = arith.index_cast %c0_i32 : i32 to index
    %c0_3 = arith.constant 0 : index
    %11 = vector.load %arg0[%c0_2, %10, %c0_3] : memref<2x8x128xf32, #tpu.memory_space<vmem>>, vector<2x1x128xf32>
    %12 = vector.shape_cast %11 : vector<2x1x128xf32> to vector<2x128xf32>
    %13 = arith.truncf %8 : vector<2x32xf32> to vector<2x32xbf16>
    %cst_4 = arith.constant dense<0.000000e+00> : vector<2x128xf32>
    %14 = tpu.matmul %13, %1, %cst_4 {dimension_numbers = #tpu.dot_dimension_numbers<[1], [0], [0], [1], [0, 0, 1, 1], [], []>} : vector<2x32xbf16>, vector<32x128xbf16>, vector<2x128xf32> -> vector<2x128xf32>
    %15 = arith.addf %12, %14 : vector<2x128xf32>
    %16 = math.tanh %15 : vector<2x128xf32>
    %17 = arith.negf %15 : vector<2x128xf32>
    %18 = math.exp %17 : vector<2x128xf32>
    %cst_5 = arith.constant 1.000000e+00 : f32
    %19 = vector.broadcast %cst_5 : f32 to vector<2x128xf32>
    %20 = arith.addf %19, %18 : vector<2x128xf32>
    %21 = arith.divf %19, %20 : vector<2x128xf32>
    %22 = arith.select %7, %16, %21 : vector<2x128xi1>, vector<2x128xf32>
    %23 = vector.extract_strided_slice %22 {offsets = [0, 0], sizes = [2, 32], strides = [1, 1]} : vector<2x128xf32> to vector<2x32xf32>
    %24 = vector.extract_strided_slice %22 {offsets = [0, 32], sizes = [2, 32], strides = [1, 1]} : vector<2x128xf32> to vector<2x32xf32>
    %25 = vector.extract_strided_slice %22 {offsets = [0, 64], sizes = [2, 32], strides = [1, 1]} : vector<2x128xf32> to vector<2x32xf32>
    %26 = vector.extract_strided_slice %22 {offsets = [0, 96], sizes = [2, 32], strides = [1, 1]} : vector<2x128xf32> to vector<2x32xf32>
    %27 = arith.mulf %24, %9 : vector<2x32xf32>
    %28 = arith.mulf %23, %25 : vector<2x32xf32>
    %29 = arith.addf %27, %28 : vector<2x32xf32>
    %30 = math.tanh %29 : vector<2x32xf32>
    %31 = arith.mulf %26, %30 : vector<2x32xf32>
    %32 = vector.shape_cast %31 : vector<2x32xf32> to vector<2x1x32xf32>
    %c0_6 = arith.constant 0 : index
    %33 = arith.index_cast %c0_i32 : i32 to index
    %c0_7 = arith.constant 0 : index
    %34 = vector.load %arg4[%c0_6, %33, %c0_7] : memref<2x8x33xf32, #tpu.memory_space<vmem>>, vector<2x1x32xf32>
    tpu.vector_store %arg4[%c0_6, %33, %c0_7], %32 {strides = array<i32>} : memref<2x8x33xf32, #tpu.memory_space<vmem>>, vector<2x1x32xf32>,
    %c1_i32 = arith.constant 1 : i32
    %c0_8 = arith.constant 0 : index
    %35 = arith.index_cast %c1_i32 : i32 to index
    %c0_9 = arith.constant 0 : index
    %36 = vector.load %arg0[%c0_8, %35, %c0_9] : memref<2x8x128xf32, #tpu.memory_space<vmem>>, vector<2x1x128xf32>
    %37 = vector.shape_cast %36 : vector<2x1x128xf32> to vector<2x128xf32>
    %38 = arith.truncf %31 : vector<2x32xf32> to vector<2x32xbf16>
    %cst_10 = arith.constant dense<0.000000e+00> : vector<2x128xf32>
    %39 = tpu.matmul %38, %1, %cst_10 {dimension_numbers = #tpu.dot_dimension_numbers<[1], [0], [0], [1], [0, 0, 1, 1], [], []>} : vector<2x32xbf16>, vector<32x128xbf16>, vector<2x128xf32> -> vector<2x128xf32>
    %40 = arith.addf %37, %39 : vector<2x128xf32>
    %41 = math.tanh %40 : vector<2x128xf32>
    %42 = arith.negf %40 : vector<2x128xf32>
    %43 = math.exp %42 : vector<2x128xf32>
    %cst_11 = arith.constant 1.000000e+00 : f32
    %44 = vector.broadcast %cst_11 : f32 to vector<2x128xf32>
    %45 = arith.addf %44, %43 : vector<2x128xf32>
    %46 = arith.divf %44, %45 : vector<2x128xf32>
    %47 = arith.select %7, %41, %46 : vector<2x128xi1>, vector<2x128xf32>
    %48 = vector.extract_strided_slice %47 {offsets = [0, 0], sizes = [2, 32], strides = [1, 1]} : vector<2x128xf32> to vector<2x32xf32>
    %49 = vector.extract_strided_slice %47 {offsets = [0, 32], sizes = [2, 32], strides = [1, 1]} : vector<2x128xf32> to vector<2x32xf32>
    %50 = vector.extract_strided_slice %47 {offsets = [0, 64], sizes = [2, 32], strides = [1, 1]} : vector<2x128xf32> to vector<2x32xf32>
    %51 = vector.extract_strided_slice %47 {offsets = [0, 96], sizes = [2, 32], strides = [1, 1]} : vector<2x128xf32> to vector<2x32xf32>
    %52 = arith.mulf %49, %29 : vector<2x32xf32>
    %53 = arith.mulf %48, %50 : vector<2x32xf32>
    %54 = arith.addf %52, %53 : vector<2x32xf32>
    %55 = math.tanh %54 : vector<2x32xf32>
    %56 = arith.mulf %51, %55 : vector<2x32xf32>
    %57 = vector.shape_cast %56 : vector<2x32xf32> to vector<2x1x32xf32>
    %c0_12 = arith.constant 0 : index
    %58 = arith.index_cast %c1_i32 : i32 to index
    %c0_13 = arith.constant 0 : index
    %59 = vector.load %arg4[%c0_12, %58, %c0_13] : memref<2x8x33xf32, #tpu.memory_space<vmem>>, vector<2x1x32xf32>
    tpu.vector_store %arg4[%c0_12, %58, %c0_13], %57 {strides = array<i32>} : memref<2x8x33xf32, #tpu.memory_space<vmem>>, vector<2x1x32xf32>,
    %c2_i32 = arith.constant 2 : i32
    %c0_14 = arith.constant 0 : index
    %60 = arith.index_cast %c2_i32 : i32 to index
    %c0_15 = arith.constant 0 : index
    %61 = vector.load %arg0[%c0_14, %60, %c0_15] : memref<2x8x128xf32, #tpu.memory_space<vmem>>, vector<2x1x128xf32>
    %62 = vector.shape_cast %61 : vector<2x1x128xf32> to vector<2x128xf32>
    %63 = arith.truncf %56 : vector<2x32xf32> to vector<2x32xbf16>
    %cst_16 = arith.constant dense<0.000000e+00> : vector<2x128xf32>
    %64 = tpu.matmul %63, %1, %cst_16 {dimension_numbers = #tpu.dot_dimension_numbers<[1], [0], [0], [1], [0, 0, 1, 1], [], []>} : vector<2x32xbf16>, vector<32x128xbf16>, vector<2x128xf32> -> vector<2x128xf32>
    %65 = arith.addf %62, %64 : vector<2x128xf32>
    %66 = math.tanh %65 : vector<2x128xf32>
    %67 = arith.negf %65 : vector<2x128xf32>
    %68 = math.exp %67 : vector<2x128xf32>
    %cst_17 = arith.constant 1.000000e+00 : f32
    %69 = vector.broadcast %cst_17 : f32 to vector<2x128xf32>
    %70 = arith.addf %69, %68 : vector<2x128xf32>
    %71 = arith.divf %69, %70 : vector<2x128xf32>
    %72 = arith.select %7, %66, %71 : vector<2x128xi1>, vector<2x128xf32>
    %73 = vector.extract_strided_slice %72 {offsets = [0, 0], sizes = [2, 32], strides = [1, 1]} : vector<2x128xf32> to vector<2x32xf32>
    %74 = vector.extract_strided_slice %72 {offsets = [0, 32], sizes = [2, 32], strides = [1, 1]} : vector<2x128xf32> to vector<2x32xf32>
    %75 = vector.extract_strided_slice %72 {offsets = [0, 64], sizes = [2, 32], strides = [1, 1]} : vector<2x128xf32> to vector<2x32xf32>
    %76 = vector.extract_strided_slice %72 {offsets = [0, 96], sizes = [2, 32], strides = [1, 1]} : vector<2x128xf32> to vector<2x32xf32>
    %77 = arith.mulf %74, %54 : vector<2x32xf32>
    %78 = arith.mulf %73, %75 : vector<2x32xf32>
    %79 = arith.addf %77, %78 : vector<2x32xf32>
    %80 = math.tanh %79 : vector<2x32xf32>
    %81 = arith.mulf %76, %80 : vector<2x32xf32>
    %82 = vector.shape_cast %81 : vector<2x32xf32> to vector<2x1x32xf32>
    %c0_18 = arith.constant 0 : index
    %83 = arith.index_cast %c2_i32 : i32 to index
    %c0_19 = arith.constant 0 : index
    %84 = vector.load %arg4[%c0_18, %83, %c0_19] : memref<2x8x33xf32, #tpu.memory_space<vmem>>, vector<2x1x32xf32>
    tpu.vector_store %arg4[%c0_18, %83, %c0_19], %82 {strides = array<i32>} : memref<2x8x33xf32, #tpu.memory_space<vmem>>, vector<2x1x32xf32>,
    %c3_i32 = arith.constant 3 : i32
    %c0_20 = arith.constant 0 : index
    %85 = arith.index_cast %c3_i32 : i32 to index
    %c0_21 = arith.constant 0 : index
    %86 = vector.load %arg0[%c0_20, %85, %c0_21] : memref<2x8x128xf32, #tpu.memory_space<vmem>>, vector<2x1x128xf32>
    %87 = vector.shape_cast %86 : vector<2x1x128xf32> to vector<2x128xf32>
    %88 = arith.truncf %81 : vector<2x32xf32> to vector<2x32xbf16>
    %cst_22 = arith.constant dense<0.000000e+00> : vector<2x128xf32>
    %89 = tpu.matmul %88, %1, %cst_22 {dimension_numbers = #tpu.dot_dimension_numbers<[1], [0], [0], [1], [0, 0, 1, 1], [], []>} : vector<2x32xbf16>, vector<32x128xbf16>, vector<2x128xf32> -> vector<2x128xf32>
    %90 = arith.addf %87, %89 : vector<2x128xf32>
    %91 = math.tanh %90 : vector<2x128xf32>
    %92 = arith.negf %90 : vector<2x128xf32>
    %93 = math.exp %92 : vector<2x128xf32>
    %cst_23 = arith.constant 1.000000e+00 : f32
    %94 = vector.broadcast %cst_23 : f32 to vector<2x128xf32>
    %95 = arith.addf %94, %93 : vector<2x128xf32>
    %96 = arith.divf %94, %95 : vector<2x128xf32>
    %97 = arith.select %7, %91, %96 : vector<2x128xi1>, vector<2x128xf32>
    %98 = vector.extract_strided_slice %97 {offsets = [0, 0], sizes = [2, 32], strides = [1, 1]} : vector<2x128xf32> to vector<2x32xf32>
    %99 = vector.extract_strided_slice %97 {offsets = [0, 32], sizes = [2, 32], strides = [1, 1]} : vector<2x128xf32> to vector<2x32xf32>
    %100 = vector.extract_strided_slice %97 {offsets = [0, 64], sizes = [2, 32], strides = [1, 1]} : vector<2x128xf32> to vector<2x32xf32>
    %101 = vector.extract_strided_slice %97 {offsets = [0, 96], sizes = [2, 32], strides = [1, 1]} : vector<2x128xf32> to vector<2x32xf32>
    %102 = arith.mulf %99, %79 : vector<2x32xf32>
    %103 = arith.mulf %98, %100 : vector<2x32xf32>
    %104 = arith.addf %102, %103 : vector<2x32xf32>
    %105 = math.tanh %104 : vector<2x32xf32>
    %106 = arith.mulf %101, %105 : vector<2x32xf32>
    %107 = vector.shape_cast %106 : vector<2x32xf32> to vector<2x1x32xf32>
    %c0_24 = arith.constant 0 : index
    %108 = arith.index_cast %c3_i32 : i32 to index
    %c0_25 = arith.constant 0 : index
    %109 = vector.load %arg4[%c0_24, %108, %c0_25] : memref<2x8x33xf32, #tpu.memory_space<vmem>>, vector<2x1x32xf32>
    tpu.vector_store %arg4[%c0_24, %108, %c0_25], %107 {strides = array<i32>} : memref<2x8x33xf32, #tpu.memory_space<vmem>>, vector<2x1x32xf32>,
    %c4_i32 = arith.constant 4 : i32
    %c0_26 = arith.constant 0 : index
    %110 = arith.index_cast %c4_i32 : i32 to index
    %c0_27 = arith.constant 0 : index
    %111 = vector.load %arg0[%c0_26, %110, %c0_27] : memref<2x8x128xf32, #tpu.memory_space<vmem>>, vector<2x1x128xf32>
    %112 = vector.shape_cast %111 : vector<2x1x128xf32> to vector<2x128xf32>
    %113 = arith.truncf %106 : vector<2x32xf32> to vector<2x32xbf16>
    %cst_28 = arith.constant dense<0.000000e+00> : vector<2x128xf32>
    %114 = tpu.matmul %113, %1, %cst_28 {dimension_numbers = #tpu.dot_dimension_numbers<[1], [0], [0], [1], [0, 0, 1, 1], [], []>} : vector<2x32xbf16>, vector<32x128xbf16>, vector<2x128xf32> -> vector<2x128xf32>
    %115 = arith.addf %112, %114 : vector<2x128xf32>
    %116 = math.tanh %115 : vector<2x128xf32>
    %117 = arith.negf %115 : vector<2x128xf32>
    %118 = math.exp %117 : vector<2x128xf32>
    %cst_29 = arith.constant 1.000000e+00 : f32
    %119 = vector.broadcast %cst_29 : f32 to vector<2x128xf32>
    %120 = arith.addf %119, %118 : vector<2x128xf32>
    %121 = arith.divf %119, %120 : vector<2x128xf32>
    %122 = arith.select %7, %116, %121 : vector<2x128xi1>, vector<2x128xf32>
    %123 = vector.extract_strided_slice %122 {offsets = [0, 0], sizes = [2, 32], strides = [1, 1]} : vector<2x128xf32> to vector<2x32xf32>
    %124 = vector.extract_strided_slice %122 {offsets = [0, 32], sizes = [2, 32], strides = [1, 1]} : vector<2x128xf32> to vector<2x32xf32>
    %125 = vector.extract_strided_slice %122 {offsets = [0, 64], sizes = [2, 32], strides = [1, 1]} : vector<2x128xf32> to vector<2x32xf32>
    %126 = vector.extract_strided_slice %122 {offsets = [0, 96], sizes = [2, 32], strides = [1, 1]} : vector<2x128xf32> to vector<2x32xf32>
    %127 = arith.mulf %124, %104 : vector<2x32xf32>
    %128 = arith.mulf %123, %125 : vector<2x32xf32>
    %129 = arith.addf %127, %128 : vector<2x32xf32>
    %130 = math.tanh %129 : vector<2x32xf32>
    %131 = arith.mulf %126, %130 : vector<2x32xf32>
    %132 = vector.shape_cast %131 : vector<2x32xf32> to vector<2x1x32xf32>
    %c0_30 = arith.constant 0 : index
    %133 = arith.index_cast %c4_i32 : i32 to index
    %c0_31 = arith.constant 0 : index
    %134 = vector.load %arg4[%c0_30, %133, %c0_31] : memref<2x8x33xf32, #tpu.memory_space<vmem>>, vector<2x1x32xf32>
    tpu.vector_store %arg4[%c0_30, %133, %c0_31], %132 {strides = array<i32>} : memref<2x8x33xf32, #tpu.memory_space<vmem>>, vector<2x1x32xf32>,
    %c5_i32 = arith.constant 5 : i32
    %c0_32 = arith.constant 0 : index
    %135 = arith.index_cast %c5_i32 : i32 to index
    %c0_33 = arith.constant 0 : index
    %136 = vector.load %arg0[%c0_32, %135, %c0_33] : memref<2x8x128xf32, #tpu.memory_space<vmem>>, vector<2x1x128xf32>
    %137 = vector.shape_cast %136 : vector<2x1x128xf32> to vector<2x128xf32>
    %138 = arith.truncf %131 : vector<2x32xf32> to vector<2x32xbf16>
    %cst_34 = arith.constant dense<0.000000e+00> : vector<2x128xf32>
    %139 = tpu.matmul %138, %1, %cst_34 {dimension_numbers = #tpu.dot_dimension_numbers<[1], [0], [0], [1], [0, 0, 1, 1], [], []>} : vector<2x32xbf16>, vector<32x128xbf16>, vector<2x128xf32> -> vector<2x128xf32>
    %140 = arith.addf %137, %139 : vector<2x128xf32>
    %141 = math.tanh %140 : vector<2x128xf32>
    %142 = arith.negf %140 : vector<2x128xf32>
    %143 = math.exp %142 : vector<2x128xf32>
    %cst_35 = arith.constant 1.000000e+00 : f32
    %144 = vector.broadcast %cst_35 : f32 to vector<2x128xf32>
    %145 = arith.addf %144, %143 : vector<2x128xf32>
    %146 = arith.divf %144, %145 : vector<2x128xf32>
    %147 = arith.select %7, %141, %146 : vector<2x128xi1>, vector<2x128xf32>
    %148 = vector.extract_strided_slice %147 {offsets = [0, 0], sizes = [2, 32], strides = [1, 1]} : vector<2x128xf32> to vector<2x32xf32>
    %149 = vector.extract_strided_slice %147 {offsets = [0, 32], sizes = [2, 32], strides = [1, 1]} : vector<2x128xf32> to vector<2x32xf32>
    %150 = vector.extract_strided_slice %147 {offsets = [0, 64], sizes = [2, 32], strides = [1, 1]} : vector<2x128xf32> to vector<2x32xf32>
    %151 = vector.extract_strided_slice %147 {offsets = [0, 96], sizes = [2, 32], strides = [1, 1]} : vector<2x128xf32> to vector<2x32xf32>
    %152 = arith.mulf %149, %129 : vector<2x32xf32>
    %153 = arith.mulf %148, %150 : vector<2x32xf32>
    %154 = arith.addf %152, %153 : vector<2x32xf32>
    %155 = math.tanh %154 : vector<2x32xf32>
    %156 = arith.mulf %151, %155 : vector<2x32xf32>
    %157 = vector.shape_cast %156 : vector<2x32xf32> to vector<2x1x32xf32>
    %c0_36 = arith.constant 0 : index
    %158 = arith.index_cast %c5_i32 : i32 to index
    %c0_37 = arith.constant 0 : index
    %159 = vector.load %arg4[%c0_36, %158, %c0_37] : memref<2x8x33xf32, #tpu.memory_space<vmem>>, vector<2x1x32xf32>
    tpu.vector_store %arg4[%c0_36, %158, %c0_37], %157 {strides = array<i32>} : memref<2x8x33xf32, #tpu.memory_space<vmem>>, vector<2x1x32xf32>,
    %c6_i32 = arith.constant 6 : i32
    %c0_38 = arith.constant 0 : index
    %160 = arith.index_cast %c6_i32 : i32 to index
    %c0_39 = arith.constant 0 : index
    %161 = vector.load %arg0[%c0_38, %160, %c0_39] : memref<2x8x128xf32, #tpu.memory_space<vmem>>, vector<2x1x128xf32>
    %162 = vector.shape_cast %161 : vector<2x1x128xf32> to vector<2x128xf32>
    %163 = arith.truncf %156 : vector<2x32xf32> to vector<2x32xbf16>
    %cst_40 = arith.constant dense<0.000000e+00> : vector<2x128xf32>
    %164 = tpu.matmul %163, %1, %cst_40 {dimension_numbers = #tpu.dot_dimension_numbers<[1], [0], [0], [1], [0, 0, 1, 1], [], []>} : vector<2x32xbf16>, vector<32x128xbf16>, vector<2x128xf32> -> vector<2x128xf32>
    %165 = arith.addf %162, %164 : vector<2x128xf32>
    %166 = math.tanh %165 : vector<2x128xf32>
    %167 = arith.negf %165 : vector<2x128xf32>
    %168 = math.exp %167 : vector<2x128xf32>
    %cst_41 = arith.constant 1.000000e+00 : f32
    %169 = vector.broadcast %cst_41 : f32 to vector<2x128xf32>
    %170 = arith.addf %169, %168 : vector<2x128xf32>
    %171 = arith.divf %169, %170 : vector<2x128xf32>
    %172 = arith.select %7, %166, %171 : vector<2x128xi1>, vector<2x128xf32>
    %173 = vector.extract_strided_slice %172 {offsets = [0, 0], sizes = [2, 32], strides = [1, 1]} : vector<2x128xf32> to vector<2x32xf32>
    %174 = vector.extract_strided_slice %172 {offsets = [0, 32], sizes = [2, 32], strides = [1, 1]} : vector<2x128xf32> to vector<2x32xf32>
    %175 = vector.extract_strided_slice %172 {offsets = [0, 64], sizes = [2, 32], strides = [1, 1]} : vector<2x128xf32> to vector<2x32xf32>
    %176 = vector.extract_strided_slice %172 {offsets = [0, 96], sizes = [2, 32], strides = [1, 1]} : vector<2x128xf32> to vector<2x32xf32>
    %177 = arith.mulf %174, %154 : vector<2x32xf32>
    %178 = arith.mulf %173, %175 : vector<2x32xf32>
    %179 = arith.addf %177, %178 : vector<2x32xf32>
    %180 = math.tanh %179 : vector<2x32xf32>
    %181 = arith.mulf %176, %180 : vector<2x32xf32>
    %182 = vector.shape_cast %181 : vector<2x32xf32> to vector<2x1x32xf32>
    %c0_42 = arith.constant 0 : index
    %183 = arith.index_cast %c6_i32 : i32 to index
    %c0_43 = arith.constant 0 : index
    %184 = vector.load %arg4[%c0_42, %183, %c0_43] : memref<2x8x33xf32, #tpu.memory_space<vmem>>, vector<2x1x32xf32>
    tpu.vector_store %arg4[%c0_42, %183, %c0_43], %182 {strides = array<i32>} : memref<2x8x33xf32, #tpu.memory_space<vmem>>, vector<2x1x32xf32>,
    %c7_i32 = arith.constant 7 : i32
    %c0_44 = arith.constant 0 : index
    %185 = arith.index_cast %c7_i32 : i32 to index
    %c0_45 = arith.constant 0 : index
    %186 = vector.load %arg0[%c0_44, %185, %c0_45] : memref<2x8x128xf32, #tpu.memory_space<vmem>>, vector<2x1x128xf32>
    %187 = vector.shape_cast %186 : vector<2x1x128xf32> to vector<2x128xf32>
    %188 = arith.truncf %181 : vector<2x32xf32> to vector<2x32xbf16>
    %cst_46 = arith.constant dense<0.000000e+00> : vector<2x128xf32>
    %189 = tpu.matmul %188, %1, %cst_46 {dimension_numbers = #tpu.dot_dimension_numbers<[1], [0], [0], [1], [0, 0, 1, 1], [], []>} : vector<2x32xbf16>, vector<32x128xbf16>, vector<2x128xf32> -> vector<2x128xf32>
    %190 = arith.addf %187, %189 : vector<2x128xf32>
    %191 = math.tanh %190 : vector<2x128xf32>
    %192 = arith.negf %190 : vector<2x128xf32>
    %193 = math.exp %192 : vector<2x128xf32>
    %cst_47 = arith.constant 1.000000e+00 : f32
    %194 = vector.broadcast %cst_47 : f32 to vector<2x128xf32>
    %195 = arith.addf %194, %193 : vector<2x128xf32>
    %196 = arith.divf %194, %195 : vector<2x128xf32>
    %197 = arith.select %7, %191, %196 : vector<2x128xi1>, vector<2x128xf32>
    %198 = vector.extract_strided_slice %197 {offsets = [0, 0], sizes = [2, 32], strides = [1, 1]} : vector<2x128xf32> to vector<2x32xf32>
    %199 = vector.extract_strided_slice %197 {offsets = [0, 32], sizes = [2, 32], strides = [1, 1]} : vector<2x128xf32> to vector<2x32xf32>
    %200 = vector.extract_strided_slice %197 {offsets = [0, 64], sizes = [2, 32], strides = [1, 1]} : vector<2x128xf32> to vector<2x32xf32>
    %201 = vector.extract_strided_slice %197 {offsets = [0, 96], sizes = [2, 32], strides = [1, 1]} : vector<2x128xf32> to vector<2x32xf32>
    %202 = arith.mulf %199, %179 : vector<2x32xf32>
    %203 = arith.mulf %198, %200 : vector<2x32xf32>
    %204 = arith.addf %202, %203 : vector<2x32xf32>
    %205 = math.tanh %204 : vector<2x32xf32>
    %206 = arith.mulf %201, %205 : vector<2x32xf32>
    %207 = vector.shape_cast %206 : vector<2x32xf32> to vector<2x1x32xf32>
    %c0_48 = arith.constant 0 : index
    %208 = arith.index_cast %c7_i32 : i32 to index
    %c0_49 = arith.constant 0 : index
    %209 = vector.load %arg4[%c0_48, %208, %c0_49] : memref<2x8x33xf32, #tpu.memory_space<vmem>>, vector<2x1x32xf32>
    tpu.vector_store %arg4[%c0_48, %208, %c0_49], %207 {strides = array<i32>} : memref<2x8x33xf32, #tpu.memory_space<vmem>>, vector<2x1x32xf32>,
    %c8_i32 = arith.constant 8 : i32
    %c0_50 = arith.constant 0 : index
    %c0_51 = arith.constant 0 : index
    %c0_52 = arith.constant 0 : index
    %210 = vector.load %arg4[%c0_50, %c0_51, %c0_52] : memref<2x8x33xf32, #tpu.memory_space<vmem>>, vector<2x8x32xf32>
    %c0_53 = arith.constant 0 : index
    %c0_54 = arith.constant 0 : index
    %211 = vector.load %arg2[%c0_53, %c0_54] : memref<1x32xf32, #tpu.memory_space<vmem>>, vector<1x32xf32>
    %212 = vector.shape_cast %211 : vector<1x32xf32> to vector<1x1x32xf32>
    %213 = vector.broadcast %212 : vector<1x1x32xf32> to vector<2x8x32xf32>
    %214 = arith.mulf %210, %213 : vector<2x8x32xf32>
    %cst_55 = arith.constant dense<0.000000e+00> : vector<2x8xf32>
    %215 = vector.multi_reduction <add>, %214, %cst_55 [2] : vector<2x8x32xf32> to vector<2x8xf32>
    %216 = vector.shape_cast %215 : vector<2x8xf32> to vector<2x8x1xf32>
    %c0_56 = arith.constant 0 : index
    %217 = memref.load %arg3[%c0_56] : memref<1xf32, #tpu.memory_space<smem>>
    %218 = vector.broadcast %217 : f32 to vector<2x8x1xf32>
    %219 = arith.addf %216, %218 : vector<2x8x1xf32>
    %220 = arith.negf %219 : vector<2x8x1xf32>
    %221 = math.exp %220 : vector<2x8x1xf32>
    %cst_57 = arith.constant 1.000000e+00 : f32
    %222 = vector.broadcast %cst_57 : f32 to vector<2x8x1xf32>
    %223 = arith.addf %222, %221 : vector<2x8x1xf32>
    %224 = arith.divf %222, %223 : vector<2x8x1xf32>
    %c0_58 = arith.constant 0 : index
    %c0_59 = arith.constant 0 : index
    %c32 = arith.constant 32 : index
    %225 = vector.load %arg4[%c0_58, %c0_59, %c32] : memref<2x8x33xf32, #tpu.memory_space<vmem>>, vector<2x8x1xf32>
    tpu.vector_store %arg4[%c0_58, %c0_59, %c32], %224 {strides = array<i32>} : memref<2x8x33xf32, #tpu.memory_space<vmem>>, vector<2x8x1xf32>,
    return
  }
}

</mosaic_0001>

<llo_original>
// kernel: prod_lstm_forward.1
$region0: #{prod_lstm_forward.1}
  #allocation0 [shape = 'u32[]', space=smem, size = 0x4, offset = 0x4, fixed_abs, tag = 'smem constant byte address 0x4 - core index']
  #allocation1 [shape = 'u32[144,128]{1,0:T(1,128)}', space=vmem, size = 0x12000, scoped, tag = 'internal scratch']
  #allocation2 [shape = 'f32[1]{0:T(128)S(6)}', space=smem, size = 0x200, scoped, tag = 'scoped memory for prod_lstm_forward.1']
  %s0 = inlined_call_operand.vmem [shape: f32[2,8,128], index: 0, kind: input, shape index: {}]
  %s1 = inlined_call_operand.vmem [shape: f32[32,128], index: 1, kind: input, shape index: {}]
  %s2 = inlined_call_operand.vmem [shape: f32[1,32], index: 2, kind: input, shape index: {}]
  %s3 = inlined_call_operand.<no memory space> [shape: f32[1], index: 3, kind: input, shape index: {}]
  %s4 = inlined_call_operand.hbm [shape: f32[2,8,33], index: 4, kind: output, shape index: {}]
  %s5 = sld [smem:[#allocation0]]
  $region26: #{prod_lstm_forward.1} parent=0
    _
  %s7 = ssub.s32 1, %s5
  %s8 = scalar_select 0, %s7, %s5
  %9 = sst [smem:[#allocation2]] %s3
  $region1: #{prod_lstm_forward.1} parent=0
    #allocation3 [shape = 'u8[8192]{0}', space=vmem, size = 0x2000, scoped, tag = 'output window, operand 0, single buffered']
    #allocation4 [shape = 's32[1]{0}', space=sflag, size = 0x4, scoped, tag = 'scoped memory for prod_lstm_forward.1']
    %10 = vsyncpa [#allocation4], 0
    // Predicated region
    $region2: #{prod_lstm_forward.1} parent=1 // pred_check
      _
    $region3: #{prod_lstm_forward.1} parent=1 // pred_check_branch
      %12 = sbr.rel (0) target = $region5
    $region4: #{prod_lstm_forward.1} parent=1 // pred_region
      _
    $region5: #{prod_lstm_forward.1} parent=1 // pred_fallthru
      _
    // Predicated region
    $region6: #{prod_lstm_forward.1} parent=1 // pred_check
      _
    $region7: #{prod_lstm_forward.1} parent=1 // pred_check_branch
      %14 = sbr.rel (0) target = $region9
    $region8: #{prod_lstm_forward.1} parent=1 // pred_region
      _
    $region9: #{prod_lstm_forward.1} parent=1 // pred_fallthru
      _
    // Predicated region
    $region10: #{prod_lstm_forward.1} parent=1 // pred_check
      _
    $region11: #{prod_lstm_forward.1} parent=1 // pred_check_branch
      %16 = sbr.rel (0) target = $region13
    $region12: #{prod_lstm_forward.1} parent=1 // pred_region
      _
    $region13: #{prod_lstm_forward.1} parent=1 // pred_fallthru
      _
    // Predicated region
    $region14: #{prod_lstm_forward.1} parent=1 // pred_check
      _
    $region15: #{prod_lstm_forward.1} parent=1 // pred_check_branch
      %18 = sbr.rel (0) target = $region17
    $region16: #{prod_lstm_forward.1} parent=1 // pred_region
      _
    $region17: #{prod_lstm_forward.1} parent=1 // pred_fallthru
      _
    %v20 = vld [vmem:[%s1] sm:$0xff]
    %v21 = vld [vmem:[%s1 + $0x8] sm:$0xff]
    %v22 = vld [vmem:[%s1 + $0x10] sm:$0xff]
    %v23 = vld [vmem:[%s1 + $0x18] sm:$0xff]
    %v24 = vpack.c.bf16 %v21, %v20
    %v25 = vpack.c.bf16 %v23, %v22
    %v26 = vlaneseq
    %v27 = vand.u32 %v26, 127
    %vm28 = vcmp.ge.s32.totalorder %v27, 64
    %vm29 = vcmp.lt.s32.totalorder %v27, 96
    %vm30 = vmand %vm28, %vm29
    %v31 = vld [vmem:[%s0] sm:$0x1]
    %v32 = vld [vmem:[%s0 + $0x8] sm:$0x1]
    %vm33 = vcmask 261120
    %v35 = vsel %vm33, 0, 0
    %37 = vmatprep.subr.bf16.mxu0 0
    %38 = vmatpush1.bf16.msra.mxu0 0
    %39 = vmatprep.subr.bf16.mxu0 0
    %40 = vmatpush1.bf16.msra.mxu0 0
    %41 = vmatprep.subr.bf16.mxu0 0
    %42 = vmatpush1.bf16.msra.mxu0 0
    %43 = vmatprep.subr.bf16.mxu0 0
    %44 = vmatpush1.bf16.msra.mxu0 0
    %45 = vmatprep.subr.bf16.mxu0 0
    %46 = vmatpush1.bf16.msra.mxu0 0
    %47 = vmatprep.subr.bf16.mxu0 0
    %48 = vmatpush1.bf16.msra.mxu0 0
    %49 = vmatprep.subr.bf16.mxu0 0
    %50 = vmatpush1.bf16.msra.mxu0 %v25
    %51 = vmatprep.subr.bf16.mxu0 0
    %52 = vmatpush1.bf16.msra.mxu0 %v24
    %53 = vmatprep.subr.bf16.mxu0 0
    %54 = vmatpush2.bf16.msra.mxu0 0
    %55 = vmatprep.subr.bf16.mxu0 0
    %56 = vmatpush2.bf16.msra.mxu0 0
    %57 = vmatprep.subr.bf16.mxu0 0
    %58 = vmatpush2.bf16.msra.mxu0 0
    %59 = vmatprep.subr.bf16.mxu0 0
    %60 = vmatpush2.bf16.msra.mxu0 0
    %61 = vmatprep.subr.bf16.mxu0 0
    %62 = vmatpush2.bf16.msra.mxu0 0
    %63 = vmatprep.subr.bf16.mxu0 0
    %64 = vmatpush2.bf16.msra.mxu0 0
    %65 = vmatprep.subr.bf16.mxu0 0
    %66 = vmatpush2.bf16.msra.mxu0 0
    %67 = vmatprep.subr.bf16.mxu0 0
    %68 = vmatpush2.bf16.msra.mxu0 0
    %69 = vmatprep.mubr.bf16.mxu0 0
    %70 = vmatmul.mubr.bf16.gmra.mxu0 %v35
    %v71 = vpop.f32.mrf.mxu0
    %v72 = vadd.f32 0.0, %v71
    %v73 = vpop.f32.mrf.mxu0
    %v74 = vpop.f32.mrf.mxu0
    %v75 = vpop.f32.mrf.mxu0
    %76 = vdwg.mxu0
    %v78 = vrot.slane %v72, 1
    %v81 = vadd.f32 %v31, %v72
    %v82 = vadd.f32 %v32, %v78
    %v83 = vtanh.pop %v81
    %v84 = vtanh.pop %v82
    %v85 = vxor.u32 %v81, 2147483648
    %v86 = vxor.u32 %v82, 2147483648
    %v87 = vmul.f32 %v85, 1.442695
    %v88 = vpow.pop %v87
    %v89 = vmul.f32 %v86, 1.442695
    %v90 = vpow.pop %v89
    %v91 = vadd.f32 %v88, 1.0
    %v92 = vadd.f32 %v90, 1.0
    %v93 = vrcp.pop %v91
    %v94 = vmul.f32 1.0, %v93
    %v95 = vrcp.pop %v92
    %v96 = vmul.f32 1.0, %v95
    %v99 = vrot.slane %v84, 7
    %vm100 = vcmask 1041409
    %v101 = vsel %vm100, %v99, %v83
    %v105 = vrot.slane %v96, 7
    %v106 = vsel %vm100, %v105, %v94
    %v108 = vsel %vm30, %v101, %v106
    %v109 = vmul.f32 %v108, 0.0
    %111 = vrot.lane.b32.xlu0 %v108, 64
    %v112 = vpop.permute.xlu0 %111
    %v114 = vmul.f32 %v108, %v112
    %116 = vrot.lane.b32.xlu0 %v114, 32
    %v117 = vpop.permute.xlu0 %116
    %v119 = vadd.f32 %v109, %v117
    %v120 = vtanh.pop %v119
    %122 = vrot.lane.b32.xlu0 %v120, 64
    %v123 = vpop.permute.xlu0 %122
    %v125 = vmul.f32 %v108, %v123
    %v128 = vunpack.c.l.s4 1966171168
    %v129 = vunpack.c.0.s8 %v128
    %v130 = vlaneseq
    %v131 = vshrl.u32 %v130, 7
    %v132 = vsub.s32 %v129, %v131
    %v133 = vrot.slane %v125, %v132
    %v134 = vcombine.high %v133, %v133
    %v136 = vunpack.c.l.s4 1966171168
    %v137 = vunpack.c.0.s8 %v136
    %v138 = vlaneseq
    %v139 = vshrl.u32 %v138, 7
    %v140 = vsub.s32 %v137, %v139
    %v141 = vrot.slane %v133, %v140
    %v143 = vunpack.c.l.s4 1966171168
    %v144 = vunpack.c.0.s8 %v143
    %v145 = vlaneseq
    %v146 = vshrl.u32 %v145, 7
    %v147 = vsub.s32 %v144, %v146
    %v148 = vrot.slane %v134, %v147
    %v149 = vlaneseq
    %v150 = vshrl.u32 %v149, 7
    %v151 = vsub.s32 0, %v150
    %v152 = vrot.slane %v141, %v151
    %v153 = vlaneseq
    %v154 = vshrl.u32 %v153, 7
    %v155 = vsub.s32 0, %v154
    %v156 = vrot.slane %v148, %v155
    %157 = vrot.lane.b32.xlu0 %v152, 32
    %v158 = vpop.permute.xlu0 %157
    %159 = vrot.lane.b32.xlu0 %v156, 32
    %v160 = vpop.permute.xlu0 %159
    %vm163 = vcmask 253952
    %164 = vst.msk [vmem:[#allocation3] sm:$0x1] %vm163, %v158
    %165 = vst.msk [vmem:[#allocation3 + $0x8] sm:$0x1] %vm163, %v160
    %v166 = vld [vmem:[%s0 + $0x1] sm:$0x1]
    %v167 = vld [vmem:[%s0 + $0x9] sm:$0x1]
    %v168 = vpack.c.bf16 %v125, %v125
    %170 = vrot.lane.b32.xlu0 %v168, 32
    %v171 = vpop.permute.xlu0 %170
    %v173 = vsel %vm33, %v171, 0
    %175 = vmatprep.subr.bf16.mxu0 0
    %176 = vmatpush1.bf16.msra.mxu0 0
    %177 = vmatprep.subr.bf16.mxu0 0
    %178 = vmatpush1.bf16.msra.mxu0 0
    %179 = vmatprep.subr.bf16.mxu0 0
    %180 = vmatpush1.bf16.msra.mxu0 0
    %181 = vmatprep.subr.bf16.mxu0 0
    %182 = vmatpush1.bf16.msra.mxu0 0
    %183 = vmatprep.subr.bf16.mxu0 0
    %184 = vmatpush1.bf16.msra.mxu0 0
    %185 = vmatprep.subr.bf16.mxu0 0
    %186 = vmatpush1.bf16.msra.mxu0 0
    %187 = vmatprep.subr.bf16.mxu0 0
    %188 = vmatpush1.bf16.msra.mxu0 %v25
    %189 = vmatprep.subr.bf16.mxu0 0
    %190 = vmatpush1.bf16.msra.mxu0 %v24
    %191 = vmatprep.subr.bf16.mxu0 0
    %192 = vmatpush2.bf16.msra.mxu0 0
    %193 = vmatprep.subr.bf16.mxu0 0
    %194 = vmatpush2.bf16.msra.mxu0 0
    %195 = vmatprep.subr.bf16.mxu0 0
    %196 = vmatpush2.bf16.msra.mxu0 0
    %197 = vmatprep.subr.bf16.mxu0 0
    %198 = vmatpush2.bf16.msra.mxu0 0
    %199 = vmatprep.subr.bf16.mxu0 0
    %200 = vmatpush2.bf16.msra.mxu0 0
    %201 = vmatprep.subr.bf16.mxu0 0
    %202 = vmatpush2.bf16.msra.mxu0 0
    %203 = vmatprep.subr.bf16.mxu0 0
    %204 = vmatpush2.bf16.msra.mxu0 0
    %205 = vmatprep.subr.bf16.mxu0 0
    %206 = vmatpush2.bf16.msra.mxu0 0
    %207 = vmatprep.mubr.bf16.mxu0 0
    %208 = vmatmul.mubr.bf16.gmra.mxu0 %v173
    %v209 = vpop.f32.mrf.mxu0
    %v210 = vadd.f32 0.0, %v209
    %v211 = vpop.f32.mrf.mxu0
    %v212 = vpop.f32.mrf.mxu0
    %v213 = vpop.f32.mrf.mxu0
    %214 = vdwg.mxu0
    %v216 = vrot.slane %v210, 1
    %v219 = vadd.f32 %v166, %v210
    %v220 = vadd.f32 %v167, %v216
    %v221 = vtanh.pop %v219
    %v222 = vtanh.pop %v220
    %v223 = vxor.u32 %v219, 2147483648
    %v224 = vxor.u32 %v220, 2147483648
    %v225 = vmul.f32 %v223, 1.442695
    %v226 = vpow.pop %v225
    %v227 = vmul.f32 %v224, 1.442695
    %v228 = vpow.pop %v227
    %v229 = vadd.f32 %v226, 1.0
    %v230 = vadd.f32 %v228, 1.0
    %v231 = vrcp.pop %v229
    %v232 = vmul.f32 1.0, %v231
    %v233 = vrcp.pop %v230
    %v234 = vmul.f32 1.0, %v233
    %v237 = vrot.slane %v222, 7
    %v238 = vsel %vm100, %v237, %v221
    %v242 = vrot.slane %v234, 7
    %v243 = vsel %vm100, %v242, %v232
    %v245 = vsel %vm30, %v238, %v243
    %v246 = vmul.f32 %v245, %v119
    %248 = vrot.lane.b32.xlu0 %v245, 64
    %v249 = vpop.permute.xlu0 %248
    %v251 = vmul.f32 %v245, %v249
    %253 = vrot.lane.b32.xlu0 %v251, 32
    %v254 = vpop.permute.xlu0 %253
    %v256 = vadd.f32 %v246, %v254
    %v257 = vtanh.pop %v256
    %259 = vrot.lane.b32.xlu0 %v257, 64
    %v260 = vpop.permute.xlu0 %259
    %v262 = vmul.f32 %v245, %v260
    %v265 = vunpack.c.l.s4 1966171168
    %v266 = vunpack.c.0.s8 %v265
    %v267 = vlaneseq
    %v268 = vshrl.u32 %v267, 7
    %v269 = vsub.s32 %v266, %v268
    %v270 = vrot.slane %v262, %v269
    %v271 = vcombine.high %v270, %v270
    %v273 = vunpack.c.l.s4 1966171168
    %v274 = vunpack.c.0.s8 %v273
    %v275 = vlaneseq
    %v276 = vshrl.u32 %v275, 7
    %v277 = vsub.s32 %v274, %v276
    %v278 = vrot.slane %v270, %v277
    %v280 = vunpack.c.l.s4 1966171168
    %v281 = vunpack.c.0.s8 %v280
    %v282 = vlaneseq
    %v283 = vshrl.u32 %v282, 7
    %v284 = vsub.s32 %v281, %v283
    %v285 = vrot.slane %v271, %v284
    %v286 = vlaneseq
    %v287 = vshrl.u32 %v286, 7
    %v288 = vsub.s32 0, %v287
    %v289 = vrot.slane %v278, %v288
    %v290 = vlaneseq
    %v291 = vshrl.u32 %v290, 7
    %v292 = vsub.s32 0, %v291
    %v293 = vrot.slane %v285, %v292
    %294 = vrot.lane.b32.xlu0 %v289, 32
    %v295 = vpop.permute.xlu0 %294
    %296 = vrot.lane.b32.xlu0 %v293, 32
    %v297 = vpop.permute.xlu0 %296
    %300 = vst.msk [vmem:[#allocation3 + $0x1] sm:$0x1] %vm163, %v295
    %301 = vst.msk [vmem:[#allocation3 + $0x9] sm:$0x1] %vm163, %v297
    %v302 = vld [vmem:[%s0 + $0x2] sm:$0x1]
    %v303 = vld [vmem:[%s0 + $0xa] sm:$0x1]
    %v304 = vpack.c.bf16 %v262, %v262
    %306 = vrot.lane.b32.xlu0 %v304, 32
    %v307 = vpop.permute.xlu0 %306
    %v309 = vsel %vm33, %v307, 0
    %311 = vmatprep.subr.bf16.mxu0 0
    %312 = vmatpush1.bf16.msra.mxu0 0
    %313 = vmatprep.subr.bf16.mxu0 0
    %314 = vmatpush1.bf16.msra.mxu0 0
    %315 = vmatprep.subr.bf16.mxu0 0
    %316 = vmatpush1.bf16.msra.mxu0 0
    %317 = vmatprep.subr.bf16.mxu0 0
    %318 = vmatpush1.bf16.msra.mxu0 0
    %319 = vmatprep.subr.bf16.mxu0 0
    %320 = vmatpush1.bf16.msra.mxu0 0
    %321 = vmatprep.subr.bf16.mxu0 0
    %322 = vmatpush1.bf16.msra.mxu0 0
    %323 = vmatprep.subr.bf16.mxu0 0
    %324 = vmatpush1.bf16.msra.mxu0 %v25
    %325 = vmatprep.subr.bf16.mxu0 0
    %326 = vmatpush1.bf16.msra.mxu0 %v24
    %327 = vmatprep.subr.bf16.mxu0 0
    %328 = vmatpush2.bf16.msra.mxu0 0
    %329 = vmatprep.subr.bf16.mxu0 0
    %330 = vmatpush2.bf16.msra.mxu0 0
    %331 = vmatprep.subr.bf16.mxu0 0
    %332 = vmatpush2.bf16.msra.mxu0 0
    %333 = vmatprep.subr.bf16.mxu0 0
    %334 = vmatpush2.bf16.msra.mxu0 0
    %335 = vmatprep.subr.bf16.mxu0 0
    %336 = vmatpush2.bf16.msra.mxu0 0
    %337 = vmatprep.subr.bf16.mxu0 0
    %338 = vmatpush2.bf16.msra.mxu0 0
    %339 = vmatprep.subr.bf16.mxu0 0
    %340 = vmatpush2.bf16.msra.mxu0 0
    %341 = vmatprep.subr.bf16.mxu0 0
    %342 = vmatpush2.bf16.msra.mxu0 0
    %343 = vmatprep.mubr.bf16.mxu0 0
    %344 = vmatmul.mubr.bf16.gmra.mxu0 %v309
    %v345 = vpop.f32.mrf.mxu0
    %v346 = vadd.f32 0.0, %v345
    %v347 = vpop.f32.mrf.mxu0
    %v348 = vpop.f32.mrf.mxu0
    %v349 = vpop.f32.mrf.mxu0
    %350 = vdwg.mxu0
    %v352 = vrot.slane %v346, 1
    %v355 = vadd.f32 %v302, %v346
    %v356 = vadd.f32 %v303, %v352
    %v357 = vtanh.pop %v355
    %v358 = vtanh.pop %v356
    %v359 = vxor.u32 %v355, 2147483648
    %v360 = vxor.u32 %v356, 2147483648
    %v361 = vmul.f32 %v359, 1.442695
    %v362 = vpow.pop %v361
    %v363 = vmul.f32 %v360, 1.442695
    %v364 = vpow.pop %v363
    %v365 = vadd.f32 %v362, 1.0
    %v366 = vadd.f32 %v364, 1.0
    %v367 = vrcp.pop %v365
    %v368 = vmul.f32 1.0, %v367
    %v369 = vrcp.pop %v366
    %v370 = vmul.f32 1.0, %v369
    %v373 = vrot.slane %v358, 7
    %v374 = vsel %vm100, %v373, %v357
    %v378 = vrot.slane %v370, 7
    %v379 = vsel %vm100, %v378, %v368
    %v381 = vsel %vm30, %v374, %v379
    %v382 = vmul.f32 %v381, %v256
    %384 = vrot.lane.b32.xlu0 %v381, 64
    %v385 = vpop.permute.xlu0 %384
    %v387 = vmul.f32 %v381, %v385
    %389 = vrot.lane.b32.xlu0 %v387, 32
    %v390 = vpop.permute.xlu0 %389
    %v392 = vadd.f32 %v382, %v390
    %v393 = vtanh.pop %v392
    %395 = vrot.lane.b32.xlu0 %v393, 64
    %v396 = vpop.permute.xlu0 %395
    %v398 = vmul.f32 %v381, %v396
    %v401 = vunpack.c.l.s4 1966171168
    %v402 = vunpack.c.0.s8 %v401
    %v403 = vlaneseq
    %v404 = vshrl.u32 %v403, 7
    %v405 = vsub.s32 %v402, %v404
    %v406 = vrot.slane %v398, %v405
    %v407 = vcombine.high %v406, %v406
    %v409 = vunpack.c.l.s4 1966171168
    %v410 = vunpack.c.0.s8 %v409
    %v411 = vlaneseq
    %v412 = vshrl.u32 %v411, 7
    %v413 = vsub.s32 %v410, %v412
    %v414 = vrot.slane %v406, %v413
    %v416 = vunpack.c.l.s4 1966171168
    %v417 = vunpack.c.0.s8 %v416
    %v418 = vlaneseq
    %v419 = vshrl.u32 %v418, 7
    %v420 = vsub.s32 %v417, %v419
    %v421 = vrot.slane %v407, %v420
    %v422 = vlaneseq
    %v423 = vshrl.u32 %v422, 7
    %v424 = vsub.s32 0, %v423
    %v425 = vrot.slane %v414, %v424
    %v426 = vlaneseq
    %v427 = vshrl.u32 %v426, 7
    %v428 = vsub.s32 0, %v427
    %v429 = vrot.slane %v421, %v428
    %430 = vrot.lane.b32.xlu0 %v425, 32
    %v431 = vpop.permute.xlu0 %430
    %432 = vrot.lane.b32.xlu0 %v429, 32
    %v433 = vpop.permute.xlu0 %432
    %436 = vst.msk [vmem:[#allocation3 + $0x2] sm:$0x1] %vm163, %v431
    %437 = vst.msk [vmem:[#allocation3 + $0xa] sm:$0x1] %vm163, %v433
    %v438 = vld [vmem:[%s0 + $0x3] sm:$0x1]
    %v439 = vld [vmem:[%s0 + $0xb] sm:$0x1]
    %v440 = vpack.c.bf16 %v398, %v398
    %442 = vrot.lane.b32.xlu0 %v440, 32
    %v443 = vpop.permute.xlu0 %442
    %v445 = vsel %vm33, %v443, 0
    %447 = vmatprep.subr.bf16.mxu0 0
    %448 = vmatpush1.bf16.msra.mxu0 0
    %449 = vmatprep.subr.bf16.mxu0 0
    %450 = vmatpush1.bf16.msra.mxu0 0
    %451 = vmatprep.subr.bf16.mxu0 0
    %452 = vmatpush1.bf16.msra.mxu0 0
    %453 = vmatprep.subr.bf16.mxu0 0
    %454 = vmatpush1.bf16.msra.mxu0 0
    %455 = vmatprep.subr.bf16.mxu0 0
    %456 = vmatpush1.bf16.msra.mxu0 0
    %457 = vmatprep.subr.bf16.mxu0 0
    %458 = vmatpush1.bf16.msra.mxu0 0
    %459 = vmatprep.subr.bf16.mxu0 0
    %460 = vmatpush1.bf16.msra.mxu0 %v25
    %461 = vmatprep.subr.bf16.mxu0 0
    %462 = vmatpush1.bf16.msra.mxu0 %v24
    %463 = vmatprep.subr.bf16.mxu0 0
    %464 = vmatpush2.bf16.msra.mxu0 0
    %465 = vmatprep.subr.bf16.mxu0 0
    %466 = vmatpush2.bf16.msra.mxu0 0
    %467 = vmatprep.subr.bf16.mxu0 0
    %468 = vmatpush2.bf16.msra.mxu0 0
    %469 = vmatprep.subr.bf16.mxu0 0
    %470 = vmatpush2.bf16.msra.mxu0 0
    %471 = vmatprep.subr.bf16.mxu0 0
    %472 = vmatpush2.bf16.msra.mxu0 0
    %473 = vmatprep.subr.bf16.mxu0 0
    %474 = vmatpush2.bf16.msra.mxu0 0
    %475 = vmatprep.subr.bf16.mxu0 0
    %476 = vmatpush2.bf16.msra.mxu0 0
    %477 = vmatprep.subr.bf16.mxu0 0
    %478 = vmatpush2.bf16.msra.mxu0 0
    %479 = vmatprep.mubr.bf16.mxu0 0
    %480 = vmatmul.mubr.bf16.gmra.mxu0 %v445
    %v481 = vpop.f32.mrf.mxu0
    %v482 = vadd.f32 0.0, %v481
    %v483 = vpop.f32.mrf.mxu0
    %v484 = vpop.f32.mrf.mxu0
    %v485 = vpop.f32.mrf.mxu0
    %486 = vdwg.mxu0
    %v488 = vrot.slane %v482, 1
    %v491 = vadd.f32 %v438, %v482
    %v492 = vadd.f32 %v439, %v488
    %v493 = vtanh.pop %v491
    %v494 = vtanh.pop %v492
    %v495 = vxor.u32 %v491, 2147483648
    %v496 = vxor.u32 %v492, 2147483648
    %v497 = vmul.f32 %v495, 1.442695
    %v498 = vpow.pop %v497
    %v499 = vmul.f32 %v496, 1.442695
    %v500 = vpow.pop %v499
    %v501 = vadd.f32 %v498, 1.0
    %v502 = vadd.f32 %v500, 1.0
    %v503 = vrcp.pop %v501
    %v504 = vmul.f32 1.0, %v503
    %v505 = vrcp.pop %v502
    %v506 = vmul.f32 1.0, %v505
    %v509 = vrot.slane %v494, 7
    %v510 = vsel %vm100, %v509, %v493
    %v514 = vrot.slane %v506, 7
    %v515 = vsel %vm100, %v514, %v504
    %v517 = vsel %vm30, %v510, %v515
    %v518 = vmul.f32 %v517, %v392
    %520 = vrot.lane.b32.xlu0 %v517, 64
    %v521 = vpop.permute.xlu0 %520
    %v523 = vmul.f32 %v517, %v521
    %525 = vrot.lane.b32.xlu0 %v523, 32
    %v526 = vpop.permute.xlu0 %525
    %v528 = vadd.f32 %v518, %v526
    %v529 = vtanh.pop %v528
    %531 = vrot.lane.b32.xlu0 %v529, 64
    %v532 = vpop.permute.xlu0 %531
    %v534 = vmul.f32 %v517, %v532
    %v537 = vunpack.c.l.s4 1966171168
    %v538 = vunpack.c.0.s8 %v537
    %v539 = vlaneseq
    %v540 = vshrl.u32 %v539, 7
    %v541 = vsub.s32 %v538, %v540
    %v542 = vrot.slane %v534, %v541
    %v543 = vcombine.high %v542, %v542
    %v545 = vunpack.c.l.s4 1966171168
    %v546 = vunpack.c.0.s8 %v545
    %v547 = vlaneseq
    %v548 = vshrl.u32 %v547, 7
    %v549 = vsub.s32 %v546, %v548
    %v550 = vrot.slane %v542, %v549
    %v552 = vunpack.c.l.s4 1966171168
    %v553 = vunpack.c.0.s8 %v552
    %v554 = vlaneseq
    %v555 = vshrl.u32 %v554, 7
    %v556 = vsub.s32 %v553, %v555
    %v557 = vrot.slane %v543, %v556
    %v558 = vlaneseq
    %v559 = vshrl.u32 %v558, 7
    %v560 = vsub.s32 0, %v559
    %v561 = vrot.slane %v550, %v560
    %v562 = vlaneseq
    %v563 = vshrl.u32 %v562, 7
    %v564 = vsub.s32 0, %v563
    %v565 = vrot.slane %v557, %v564
    %566 = vrot.lane.b32.xlu0 %v561, 32
    %v567 = vpop.permute.xlu0 %566
    %568 = vrot.lane.b32.xlu0 %v565, 32
    %v569 = vpop.permute.xlu0 %568
    %572 = vst.msk [vmem:[#allocation3 + $0x3] sm:$0x1] %vm163, %v567
    %573 = vst.msk [vmem:[#allocation3 + $0xb] sm:$0x1] %vm163, %v569
    %v574 = vld [vmem:[%s0 + $0x4] sm:$0x1]
    %v575 = vld [vmem:[%s0 + $0xc] sm:$0x1]
    %v576 = vpack.c.bf16 %v534, %v534
    %578 = vrot.lane.b32.xlu0 %v576, 32
    %v579 = vpop.permute.xlu0 %578
    %v581 = vsel %vm33, %v579, 0
    %583 = vmatprep.subr.bf16.mxu0 0
    %584 = vmatpush1.bf16.msra.mxu0 0
    %585 = vmatprep.subr.bf16.mxu0 0
    %586 = vmatpush1.bf16.msra.mxu0 0
    %587 = vmatprep.subr.bf16.mxu0 0
    %588 = vmatpush1.bf16.msra.mxu0 0
    %589 = vmatprep.subr.bf16.mxu0 0
    %590 = vmatpush1.bf16.msra.mxu0 0
    %591 = vmatprep.subr.bf16.mxu0 0
    %592 = vmatpush1.bf16.msra.mxu0 0
    %593 = vmatprep.subr.bf16.mxu0 0
    %594 = vmatpush1.bf16.msra.mxu0 0
    %595 = vmatprep.subr.bf16.mxu0 0
    %596 = vmatpush1.bf16.msra.mxu0 %v25
    %597 = vmatprep.subr.bf16.mxu0 0
    %598 = vmatpush1.bf16.msra.mxu0 %v24
    %599 = vmatprep.subr.bf16.mxu0 0
    %600 = vmatpush2.bf16.msra.mxu0 0
    %601 = vmatprep.subr.bf16.mxu0 0
    %602 = vmatpush2.bf16.msra.mxu0 0
    %603 = vmatprep.subr.bf16.mxu0 0
    %604 = vmatpush2.bf16.msra.mxu0 0
    %605 = vmatprep.subr.bf16.mxu0 0
    %606 = vmatpush2.bf16.msra.mxu0 0
    %607 = vmatprep.subr.bf16.mxu0 0
    %608 = vmatpush2.bf16.msra.mxu0 0
    %609 = vmatprep.subr.bf16.mxu0 0
    %610 = vmatpush2.bf16.msra.mxu0 0
    %611 = vmatprep.subr.bf16.mxu0 0
    %612 = vmatpush2.bf16.msra.mxu0 0
    %613 = vmatprep.subr.bf16.mxu0 0
    %614 = vmatpush2.bf16.msra.mxu0 0
    %615 = vmatprep.mubr.bf16.mxu0 0
    %616 = vmatmul.mubr.bf16.gmra.mxu0 %v581
    %v617 = vpop.f32.mrf.mxu0
    %v618 = vadd.f32 0.0, %v617
    %v619 = vpop.f32.mrf.mxu0
    %v620 = vpop.f32.mrf.mxu0
    %v621 = vpop.f32.mrf.mxu0
    %622 = vdwg.mxu0
    %v624 = vrot.slane %v618, 1
    %v627 = vadd.f32 %v574, %v618
    %v628 = vadd.f32 %v575, %v624
    %v629 = vtanh.pop %v627
    %v630 = vtanh.pop %v628
    %v631 = vxor.u32 %v627, 2147483648
    %v632 = vxor.u32 %v628, 2147483648
    %v633 = vmul.f32 %v631, 1.442695
    %v634 = vpow.pop %v633
    %v635 = vmul.f32 %v632, 1.442695
    %v636 = vpow.pop %v635
    %v637 = vadd.f32 %v634, 1.0
    %v638 = vadd.f32 %v636, 1.0
    %v639 = vrcp.pop %v637
    %v640 = vmul.f32 1.0, %v639
    %v641 = vrcp.pop %v638
    %v642 = vmul.f32 1.0, %v641
    %v645 = vrot.slane %v630, 7
    %v646 = vsel %vm100, %v645, %v629
    %v650 = vrot.slane %v642, 7
    %v651 = vsel %vm100, %v650, %v640
    %v653 = vsel %vm30, %v646, %v651
    %v654 = vmul.f32 %v653, %v528
    %656 = vrot.lane.b32.xlu0 %v653, 64
    %v657 = vpop.permute.xlu0 %656
    %v659 = vmul.f32 %v653, %v657
    %661 = vrot.lane.b32.xlu0 %v659, 32
    %v662 = vpop.permute.xlu0 %661
    %v664 = vadd.f32 %v654, %v662
    %v665 = vtanh.pop %v664
    %667 = vrot.lane.b32.xlu0 %v665, 64
    %v668 = vpop.permute.xlu0 %667
    %v670 = vmul.f32 %v653, %v668
    %v673 = vunpack.c.l.s4 1966171168
    %v674 = vunpack.c.0.s8 %v673
    %v675 = vlaneseq
    %v676 = vshrl.u32 %v675, 7
    %v677 = vsub.s32 %v674, %v676
    %v678 = vrot.slane %v670, %v677
    %v679 = vcombine.high %v678, %v678
    %v681 = vunpack.c.l.s4 1966171168
    %v682 = vunpack.c.0.s8 %v681
    %v683 = vlaneseq
    %v684 = vshrl.u32 %v683, 7
    %v685 = vsub.s32 %v682, %v684
    %v686 = vrot.slane %v678, %v685
    %v688 = vunpack.c.l.s4 1966171168
    %v689 = vunpack.c.0.s8 %v688
    %v690 = vlaneseq
    %v691 = vshrl.u32 %v690, 7
    %v692 = vsub.s32 %v689, %v691
    %v693 = vrot.slane %v679, %v692
    %v694 = vlaneseq
    %v695 = vshrl.u32 %v694, 7
    %v696 = vsub.s32 0, %v695
    %v697 = vrot.slane %v686, %v696
    %v698 = vlaneseq
    %v699 = vshrl.u32 %v698, 7
    %v700 = vsub.s32 0, %v699
    %v701 = vrot.slane %v693, %v700
    %702 = vrot.lane.b32.xlu0 %v697, 32
    %v703 = vpop.permute.xlu0 %702
    %704 = vrot.lane.b32.xlu0 %v701, 32
    %v705 = vpop.permute.xlu0 %704
    %708 = vst.msk [vmem:[#allocation3 + $0x4] sm:$0x1] %vm163, %v703
    %709 = vst.msk [vmem:[#allocation3 + $0xc] sm:$0x1] %vm163, %v705
    %v710 = vld [vmem:[%s0 + $0x5] sm:$0x1]
    %v711 = vld [vmem:[%s0 + $0xd] sm:$0x1]
    %v712 = vpack.c.bf16 %v670, %v670
    %714 = vrot.lane.b32.xlu0 %v712, 32
    %v715 = vpop.permute.xlu0 %714
    %v717 = vsel %vm33, %v715, 0
    %719 = vmatprep.subr.bf16.mxu0 0
    %720 = vmatpush1.bf16.msra.mxu0 0
    %721 = vmatprep.subr.bf16.mxu0 0
    %722 = vmatpush1.bf16.msra.mxu0 0
    %723 = vmatprep.subr.bf16.mxu0 0
    %724 = vmatpush1.bf16.msra.mxu0 0
    %725 = vmatprep.subr.bf16.mxu0 0
    %726 = vmatpush1.bf16.msra.mxu0 0
    %727 = vmatprep.subr.bf16.mxu0 0
    %728 = vmatpush1.bf16.msra.mxu0 0
    %729 = vmatprep.subr.bf16.mxu0 0
    %730 = vmatpush1.bf16.msra.mxu0 0
    %731 = vmatprep.subr.bf16.mxu0 0
    %732 = vmatpush1.bf16.msra.mxu0 %v25
    %733 = vmatprep.subr.bf16.mxu0 0
    %734 = vmatpush1.bf16.msra.mxu0 %v24
    %735 = vmatprep.subr.bf16.mxu0 0
    %736 = vmatpush2.bf16.msra.mxu0 0
    %737 = vmatprep.subr.bf16.mxu0 0
    %738 = vmatpush2.bf16.msra.mxu0 0
    %739 = vmatprep.subr.bf16.mxu0 0
    %740 = vmatpush2.bf16.msra.mxu0 0
    %741 = vmatprep.subr.bf16.mxu0 0
    %742 = vmatpush2.bf16.msra.mxu0 0
    %743 = vmatprep.subr.bf16.mxu0 0
    %744 = vmatpush2.bf16.msra.mxu0 0
    %745 = vmatprep.subr.bf16.mxu0 0
    %746 = vmatpush2.bf16.msra.mxu0 0
    %747 = vmatprep.subr.bf16.mxu0 0
    %748 = vmatpush2.bf16.msra.mxu0 0
    %749 = vmatprep.subr.bf16.mxu0 0
    %750 = vmatpush2.bf16.msra.mxu0 0
    %751 = vmatprep.mubr.bf16.mxu0 0
    %752 = vmatmul.mubr.bf16.gmra.mxu0 %v717
    %v753 = vpop.f32.mrf.mxu0
    %v754 = vadd.f32 0.0, %v753
    %v755 = vpop.f32.mrf.mxu0
    %v756 = vpop.f32.mrf.mxu0
    %v757 = vpop.f32.mrf.mxu0
    %758 = vdwg.mxu0
    %v760 = vrot.slane %v754, 1
    %v763 = vadd.f32 %v710, %v754
    %v764 = vadd.f32 %v711, %v760
    %v765 = vtanh.pop %v763
    %v766 = vtanh.pop %v764
    %v767 = vxor.u32 %v763, 2147483648
    %v768 = vxor.u32 %v764, 2147483648
    %v769 = vmul.f32 %v767, 1.442695
    %v770 = vpow.pop %v769
    %v771 = vmul.f32 %v768, 1.442695
    %v772 = vpow.pop %v771
    %v773 = vadd.f32 %v770, 1.0
    %v774 = vadd.f32 %v772, 1.0
    %v775 = vrcp.pop %v773
    %v776 = vmul.f32 1.0, %v775
    %v777 = vrcp.pop %v774
    %v778 = vmul.f32 1.0, %v777
    %v781 = vrot.slane %v766, 7
    %v782 = vsel %vm100, %v781, %v765
    %v786 = vrot.slane %v778, 7
    %v787 = vsel %vm100, %v786, %v776
    %v789 = vsel %vm30, %v782, %v787
    %v790 = vmul.f32 %v789, %v664
    %792 = vrot.lane.b32.xlu0 %v789, 64
    %v793 = vpop.permute.xlu0 %792
    %v795 = vmul.f32 %v789, %v793
    %797 = vrot.lane.b32.xlu0 %v795, 32
    %v798 = vpop.permute.xlu0 %797
    %v800 = vadd.f32 %v790, %v798
    %v801 = vtanh.pop %v800
    %803 = vrot.lane.b32.xlu0 %v801, 64
    %v804 = vpop.permute.xlu0 %803
    %v806 = vmul.f32 %v789, %v804
    %v809 = vunpack.c.l.s4 1966171168
    %v810 = vunpack.c.0.s8 %v809
    %v811 = vlaneseq
    %v812 = vshrl.u32 %v811, 7
    %v813 = vsub.s32 %v810, %v812
    %v814 = vrot.slane %v806, %v813
    %v815 = vcombine.high %v814, %v814
    %v817 = vunpack.c.l.s4 1966171168
    %v818 = vunpack.c.0.s8 %v817
    %v819 = vlaneseq
    %v820 = vshrl.u32 %v819, 7
    %v821 = vsub.s32 %v818, %v820
    %v822 = vrot.slane %v814, %v821
    %v824 = vunpack.c.l.s4 1966171168
    %v825 = vunpack.c.0.s8 %v824
    %v826 = vlaneseq
    %v827 = vshrl.u32 %v826, 7
    %v828 = vsub.s32 %v825, %v827
    %v829 = vrot.slane %v815, %v828
    %v830 = vlaneseq
    %v831 = vshrl.u32 %v830, 7
    %v832 = vsub.s32 0, %v831
    %v833 = vrot.slane %v822, %v832
    %v834 = vlaneseq
    %v835 = vshrl.u32 %v834, 7
    %v836 = vsub.s32 0, %v835
    %v837 = vrot.slane %v829, %v836
    %838 = vrot.lane.b32.xlu0 %v833, 32
    %v839 = vpop.permute.xlu0 %838
    %840 = vrot.lane.b32.xlu0 %v837, 32
    %v841 = vpop.permute.xlu0 %840
    %844 = vst.msk [vmem:[#allocation3 + $0x5] sm:$0x1] %vm163, %v839
    %845 = vst.msk [vmem:[#allocation3 + $0xd] sm:$0x1] %vm163, %v841
    %v846 = vld [vmem:[%s0 + $0x6] sm:$0x1]
    %v847 = vld [vmem:[%s0 + $0xe] sm:$0x1]
    %v848 = vpack.c.bf16 %v806, %v806
    %850 = vrot.lane.b32.xlu0 %v848, 32
    %v851 = vpop.permute.xlu0 %850
    %v853 = vsel %vm33, %v851, 0
    %855 = vmatprep.subr.bf16.mxu0 0
    %856 = vmatpush1.bf16.msra.mxu0 0
    %857 = vmatprep.subr.bf16.mxu0 0
    %858 = vmatpush1.bf16.msra.mxu0 0
    %859 = vmatprep.subr.bf16.mxu0 0
    %860 = vmatpush1.bf16.msra.mxu0 0
    %861 = vmatprep.subr.bf16.mxu0 0
    %862 = vmatpush1.bf16.msra.mxu0 0
    %863 = vmatprep.subr.bf16.mxu0 0
    %864 = vmatpush1.bf16.msra.mxu0 0
    %865 = vmatprep.subr.bf16.mxu0 0
    %866 = vmatpush1.bf16.msra.mxu0 0
    %867 = vmatprep.subr.bf16.mxu0 0
    %868 = vmatpush1.bf16.msra.mxu0 %v25
    %869 = vmatprep.subr.bf16.mxu0 0
    %870 = vmatpush1.bf16.msra.mxu0 %v24
    %871 = vmatprep.subr.bf16.mxu0 0
    %872 = vmatpush2.bf16.msra.mxu0 0
    %873 = vmatprep.subr.bf16.mxu0 0
    %874 = vmatpush2.bf16.msra.mxu0 0
    %875 = vmatprep.subr.bf16.mxu0 0
    %876 = vmatpush2.bf16.msra.mxu0 0
    %877 = vmatprep.subr.bf16.mxu0 0
    %878 = vmatpush2.bf16.msra.mxu0 0
    %879 = vmatprep.subr.bf16.mxu0 0
    %880 = vmatpush2.bf16.msra.mxu0 0
    %881 = vmatprep.subr.bf16.mxu0 0
    %882 = vmatpush2.bf16.msra.mxu0 0
    %883 = vmatprep.subr.bf16.mxu0 0
    %884 = vmatpush2.bf16.msra.mxu0 0
    %885 = vmatprep.subr.bf16.mxu0 0
    %886 = vmatpush2.bf16.msra.mxu0 0
    %887 = vmatprep.mubr.bf16.mxu0 0
    %888 = vmatmul.mubr.bf16.gmra.mxu0 %v853
    %v889 = vpop.f32.mrf.mxu0
    %v890 = vadd.f32 0.0, %v889
    %v891 = vpop.f32.mrf.mxu0
    %v892 = vpop.f32.mrf.mxu0
    %v893 = vpop.f32.mrf.mxu0
    %894 = vdwg.mxu0
    %v896 = vrot.slane %v890, 1
    %v899 = vadd.f32 %v846, %v890
    %v900 = vadd.f32 %v847, %v896
    %v901 = vtanh.pop %v899
    %v902 = vtanh.pop %v900
    %v903 = vxor.u32 %v899, 2147483648
    %v904 = vxor.u32 %v900, 2147483648
    %v905 = vmul.f32 %v903, 1.442695
    %v906 = vpow.pop %v905
    %v907 = vmul.f32 %v904, 1.442695
    %v908 = vpow.pop %v907
    %v909 = vadd.f32 %v906, 1.0
    %v910 = vadd.f32 %v908, 1.0
    %v911 = vrcp.pop %v909
    %v912 = vmul.f32 1.0, %v911
    %v913 = vrcp.pop %v910
    %v914 = vmul.f32 1.0, %v913
    %v917 = vrot.slane %v902, 7
    %v918 = vsel %vm100, %v917, %v901
    %v922 = vrot.slane %v914, 7
    %v923 = vsel %vm100, %v922, %v912
    %v925 = vsel %vm30, %v918, %v923
    %v926 = vmul.f32 %v925, %v800
    %928 = vrot.lane.b32.xlu0 %v925, 64
    %v929 = vpop.permute.xlu0 %928
    %v931 = vmul.f32 %v925, %v929
    %933 = vrot.lane.b32.xlu0 %v931, 32
    %v934 = vpop.permute.xlu0 %933
    %v936 = vadd.f32 %v926, %v934
    %v937 = vtanh.pop %v936
    %939 = vrot.lane.b32.xlu0 %v937, 64
    %v940 = vpop.permute.xlu0 %939
    %v942 = vmul.f32 %v925, %v940
    %v945 = vunpack.c.l.s4 1966171168
    %v946 = vunpack.c.0.s8 %v945
    %v947 = vlaneseq
    %v948 = vshrl.u32 %v947, 7
    %v949 = vsub.s32 %v946, %v948
    %v950 = vrot.slane %v942, %v949
    %v951 = vcombine.high %v950, %v950
    %v953 = vunpack.c.l.s4 1966171168
    %v954 = vunpack.c.0.s8 %v953
    %v955 = vlaneseq
    %v956 = vshrl.u32 %v955, 7
    %v957 = vsub.s32 %v954, %v956
    %v958 = vrot.slane %v950, %v957
    %v960 = vunpack.c.l.s4 1966171168
    %v961 = vunpack.c.0.s8 %v960
    %v962 = vlaneseq
    %v963 = vshrl.u32 %v962, 7
    %v964 = vsub.s32 %v961, %v963
    %v965 = vrot.slane %v951, %v964
    %v966 = vlaneseq
    %v967 = vshrl.u32 %v966, 7
    %v968 = vsub.s32 0, %v967
    %v969 = vrot.slane %v958, %v968
    %v970 = vlaneseq
    %v971 = vshrl.u32 %v970, 7
    %v972 = vsub.s32 0, %v971
    %v973 = vrot.slane %v965, %v972
    %974 = vrot.lane.b32.xlu0 %v969, 32
    %v975 = vpop.permute.xlu0 %974
    %976 = vrot.lane.b32.xlu0 %v973, 32
    %v977 = vpop.permute.xlu0 %976
    %980 = vst.msk [vmem:[#allocation3 + $0x6] sm:$0x1] %vm163, %v975
    %981 = vst.msk [vmem:[#allocation3 + $0xe] sm:$0x1] %vm163, %v977
    %v982 = vld [vmem:[%s0 + $0x7] sm:$0x1]
    %v983 = vld [vmem:[%s0 + $0xf] sm:$0x1]
    %v984 = vpack.c.bf16 %v942, %v942
    %986 = vrot.lane.b32.xlu0 %v984, 32
    %v987 = vpop.permute.xlu0 %986
    %v989 = vsel %vm33, %v987, 0
    %991 = vmatprep.subr.bf16.mxu0 0
    %992 = vmatpush1.bf16.msra.mxu0 0
    %993 = vmatprep.subr.bf16.mxu0 0
    %994 = vmatpush1.bf16.msra.mxu0 0
    %995 = vmatprep.subr.bf16.mxu0 0
    %996 = vmatpush1.bf16.msra.mxu0 0
    %997 = vmatprep.subr.bf16.mxu0 0
    %998 = vmatpush1.bf16.msra.mxu0 0
    %999 = vmatprep.subr.bf16.mxu0 0
    %1000 = vmatpush1.bf16.msra.mxu0 0
    %1001 = vmatprep.subr.bf16.mxu0 0
    %1002 = vmatpush1.bf16.msra.mxu0 0
    %1003 = vmatprep.subr.bf16.mxu0 0
    %1004 = vmatpush1.bf16.msra.mxu0 %v25
    %1005 = vmatprep.subr.bf16.mxu0 0
    %1006 = vmatpush1.bf16.msra.mxu0 %v24
    %1007 = vmatprep.subr.bf16.mxu0 0
    %1008 = vmatpush2.bf16.msra.mxu0 0
    %1009 = vmatprep.subr.bf16.mxu0 0
    %1010 = vmatpush2.bf16.msra.mxu0 0
    %1011 = vmatprep.subr.bf16.mxu0 0
    %1012 = vmatpush2.bf16.msra.mxu0 0
    %1013 = vmatprep.subr.bf16.mxu0 0
    %1014 = vmatpush2.bf16.msra.mxu0 0
    %1015 = vmatprep.subr.bf16.mxu0 0
    %1016 = vmatpush2.bf16.msra.mxu0 0
    %1017 = vmatprep.subr.bf16.mxu0 0
    %1018 = vmatpush2.bf16.msra.mxu0 0
    %1019 = vmatprep.subr.bf16.mxu0 0
    %1020 = vmatpush2.bf16.msra.mxu0 0
    %1021 = vmatprep.subr.bf16.mxu0 0
    %1022 = vmatpush2.bf16.msra.mxu0 0
    %1023 = vmatprep.mubr.bf16.mxu0 0
    %1024 = vmatmul.mubr.bf16.gmra.mxu0 %v989
    %v1025 = vpop.f32.mrf.mxu0
    %v1026 = vadd.f32 0.0, %v1025
    %v1027 = vpop.f32.mrf.mxu0
    %v1028 = vpop.f32.mrf.mxu0
    %v1029 = vpop.f32.mrf.mxu0
    %1030 = vdwg.mxu0
    %v1032 = vrot.slane %v1026, 1
    %v1035 = vadd.f32 %v982, %v1026
    %v1036 = vadd.f32 %v983, %v1032
    %v1037 = vtanh.pop %v1035
    %v1038 = vtanh.pop %v1036
    %v1039 = vxor.u32 %v1035, 2147483648
    %v1040 = vxor.u32 %v1036, 2147483648
    %v1041 = vmul.f32 %v1039, 1.442695
    %v1042 = vpow.pop %v1041
    %v1043 = vmul.f32 %v1040, 1.442695
    %v1044 = vpow.pop %v1043
    %v1045 = vadd.f32 %v1042, 1.0
    %v1046 = vadd.f32 %v1044, 1.0
    %v1047 = vrcp.pop %v1045
    %v1048 = vmul.f32 1.0, %v1047
    %v1049 = vrcp.pop %v1046
    %v1050 = vmul.f32 1.0, %v1049
    %v1053 = vrot.slane %v1038, 7
    %v1054 = vsel %vm100, %v1053, %v1037
    %v1058 = vrot.slane %v1050, 7
    %v1059 = vsel %vm100, %v1058, %v1048
    %v1061 = vsel %vm30, %v1054, %v1059
    %v1062 = vmul.f32 %v1061, %v936
    %1064 = vrot.lane.b32.xlu0 %v1061, 64
    %v1065 = vpop.permute.xlu0 %1064
    %v1067 = vmul.f32 %v1061, %v1065
    %1069 = vrot.lane.b32.xlu0 %v1067, 32
    %v1070 = vpop.permute.xlu0 %1069
    %v1072 = vadd.f32 %v1062, %v1070
    %v1073 = vtanh.pop %v1072
    %1075 = vrot.lane.b32.xlu0 %v1073, 64
    %v1076 = vpop.permute.xlu0 %1075
    %v1078 = vmul.f32 %v1061, %v1076
    %v1081 = vunpack.c.l.s4 1966171168
    %v1082 = vunpack.c.0.s8 %v1081
    %v1083 = vlaneseq
    %v1084 = vshrl.u32 %v1083, 7
    %v1085 = vsub.s32 %v1082, %v1084
    %v1086 = vrot.slane %v1078, %v1085
    %v1087 = vcombine.high %v1086, %v1086
    %v1089 = vunpack.c.l.s4 1966171168
    %v1090 = vunpack.c.0.s8 %v1089
    %v1091 = vlaneseq
    %v1092 = vshrl.u32 %v1091, 7
    %v1093 = vsub.s32 %v1090, %v1092
    %v1094 = vrot.slane %v1086, %v1093
    %v1096 = vunpack.c.l.s4 1966171168
    %v1097 = vunpack.c.0.s8 %v1096
    %v1098 = vlaneseq
    %v1099 = vshrl.u32 %v1098, 7
    %v1100 = vsub.s32 %v1097, %v1099
    %v1101 = vrot.slane %v1087, %v1100
    %v1102 = vlaneseq
    %v1103 = vshrl.u32 %v1102, 7
    %v1104 = vsub.s32 0, %v1103
    %v1105 = vrot.slane %v1094, %v1104
    %v1106 = vlaneseq
    %v1107 = vshrl.u32 %v1106, 7
    %v1108 = vsub.s32 0, %v1107
    %v1109 = vrot.slane %v1101, %v1108
    %1110 = vrot.lane.b32.xlu0 %v1105, 32
    %v1111 = vpop.permute.xlu0 %1110
    %1112 = vrot.lane.b32.xlu0 %v1109, 32
    %v1113 = vpop.permute.xlu0 %1112
    %1116 = vst.msk [vmem:[#allocation3 + $0x7] sm:$0x1] %vm163, %v1111
    %1117 = vst.msk [vmem:[#allocation3 + $0xf] sm:$0x1] %vm163, %v1113
    %v1118 = vld [vmem:[#allocation3] sm:$0xff]
    %v1119 = vld [vmem:[#allocation3 + $0x8] sm:$0xff]
    %v1120 = vld [vmem:[%s2] sm:$0x1]
    %v1122 = vlaneseq
    %v1123 = vshrl.u32 %v1122, 7
    %v1124 = vsub.s32 0, %v1123
    %v1125 = vrot.slane %v1120, %v1124
    %v1127 = vmul.f32 %v1118, %v1125
    %v1128 = vmul.f32 %v1119, %v1125
    %v1129 = vsel %vm33, %v1127, 0.0
    %1130 = vadd.xlane.f32.xlu0 %v1129
    %v1131 = vpop.xlane.xlu0 %1130
    %v1132 = vsel %vm33, %v1128, 0.0
    %1133 = vadd.xlane.f32.xlu0 %v1132
    %v1134 = vpop.xlane.xlu0 %1133
    %s1135 = sld [smem:[#allocation2]]
    %v1136 = vstv %s1135
    %v1137 = vadd.f32 %v1131, %v1136
    %v1138 = vadd.f32 %v1134, %v1136
    %v1139 = vxor.u32 %v1137, 2147483648
    %v1140 = vxor.u32 %v1138, 2147483648
    %v1141 = vmul.f32 %v1139, 1.442695
    %v1142 = vpow.pop %v1141
    %v1143 = vmul.f32 %v1140, 1.442695
    %v1144 = vpow.pop %v1143
    %v1145 = vadd.f32 %v1142, 1.0
    %v1146 = vadd.f32 %v1144, 1.0
    %v1147 = vrcp.pop %v1145
    %v1148 = vmul.f32 1.0, %v1147
    %v1149 = vrcp.pop %v1146
    %v1150 = vmul.f32 1.0, %v1149
    %vm1151 = vcmask 269568
    %1152 = vst.msk [vmem:[#allocation3] sm:$0xff] %vm1151, %v1148
    %1153 = vst.msk [vmem:[#allocation3 + $0x8] sm:$0xff] %vm1151, %v1150
    // Predicated region
    $region18: #{prod_lstm_forward.1} parent=1 // pred_check
      _
    $region19: #{prod_lstm_forward.1} parent=1 // pred_check_branch
      %1155 = sbr.rel (0) target = $region21
    $region20: #{prod_lstm_forward.1} parent=1 // pred_region
      %s1157 = ssub.s32 256, 256
      %1158 = vsyncadd [#allocation4], %s1157
      %s1159 = sshll.u32 [#allocation3], 4
      %s1160 = int_to_ptr.vmem [resolvable:$true] %s1159
      %1165 = dma.vmem_to_hbm [thread:$0]  %s1160, 256, %s4, [#allocation4], 128, 128, 8
    $region21: #{prod_lstm_forward.1} parent=1 // pred_fallthru
      _
    // Predicated region
    $region22: #{prod_lstm_forward.1} parent=1 // pred_check
      _
    $region23: #{prod_lstm_forward.1} parent=1 // pred_check_branch
      %1167 = sbr.rel (0) target = $region25
    $region24: #{prod_lstm_forward.1} parent=1 // pred_region
      %1168 = dma.done [#allocation4], 256
    $region25: #{prod_lstm_forward.1} parent=1 // pred_fallthru
      _
    %1169 = vsyncpa [#allocation4], 1

</llo_original>
